<compile_context>
chip_gen: v7x
topology: tpu7x:2x2x1
jax: 0.10.0
libtpu: 0.0.40
codegen_flags: <defaults>
</compile_context>

<pallas_src>
import jax
import jax.numpy as jnp
from jax.experimental import pallas as pl
from jax.experimental.pallas import tpu as pltpu


def conv_gelu_kernel(w_ref, p_ref, o_ref):
    # (8, K_pad) @ (K_pad, TILE_M) -> (8, TILE_M), f32 accumulation on the MXU.
    # Bias is already folded into the matmul via the ones-row / bias-column.
    v1 = jnp.dot(w_ref[...], p_ref[...], preferred_element_type=jnp.float32)
    # Exact elementwise chain from the PyTorch forward (tanh-approx GELU), f32.
    v2 = v1 * 0.5
    v3 = v1 * v1
    v4 = v3 * v1
    v5 = v4 * 0.044715
    v6 = v1 + v5
    v7 = v6 * 0.7978845608028654
    v8 = jnp.tanh(v7)
    v9 = v8 + 1.0
    o_ref[...] = (v2 * v9).astype(o_ref.dtype)


def conv2d_gelu(x, weight, bias, *, stride, padding, tile_m=128):
    """x: (N, Cin, H, W) NCHW f32; weight: (Cout, Cin, kh, kw); bias: (Cout,)."""
    n, cin, _, _ = x.shape
    cout, _, kh, kw = weight.shape

    # Spatial zero-pad, then channel-major layout so the patch matrix comes out
    # directly as (K, M) with M on the (fast) lane axis -> no extra transpose.
    xp = jnp.pad(x, ((0, 0), (0, 0), (padding, padding), (padding, padding)))
    hp, wp = xp.shape[2], xp.shape[3]
    ho = (hp - kh) // stride + 1
    wo = (wp - kw) // stride + 1
    xc = xp.transpose(1, 0, 2, 3)                      # (Cin, N, Hp, Wp), ~29 KB

    cols = []
    for i in range(kh):
        for j in range(kw):
            cols.append(xc[:, :, i:i + stride * ho:stride, j:j + stride * wo:stride])
    k = cin * kh * kw
    m = n * ho * wo
    # (Cin, kh*kw, N, Ho, Wo) -> (K, M); K order matches weight.reshape(Cout, K).
    patches = jnp.stack(cols, axis=1).reshape(k, m).astype(jnp.bfloat16)

    # Pad K (sublane / MXU contraction) to a multiple of 128, reserving one row
    # for the bias fold; pad M (lane) up to a multiple of the tile.
    k_pad = ((k + 1 + 127) // 128) * 128               # 686 -> 768
    m_pad = ((m + tile_m - 1) // tile_m) * tile_m      # 288 -> 384
    cout_pad = 8

    p_full = jnp.concatenate(
        [patches,
         jnp.ones((1, m), jnp.bfloat16),               # bias row (all ones)
         jnp.zeros((k_pad - k - 1, m), jnp.bfloat16)], axis=0)
    p_full = jnp.pad(p_full, ((0, 0), (0, m_pad - m)))

    w_mat = weight.reshape(cout, k).astype(jnp.float32)
    w_aug = jnp.concatenate(
        [w_mat,
         bias.reshape(cout, 1).astype(jnp.float32),    # bias column
         jnp.zeros((cout, k_pad - k - 1), jnp.float32)], axis=1)
    w_aug = jnp.pad(w_aug, ((0, cout_pad - cout), (0, 0))).astype(jnp.bfloat16)

    grid = (m_pad // tile_m,)
    out = pl.pallas_call(
        conv_gelu_kernel,
        out_shape=jax.ShapeDtypeStruct((cout_pad, m_pad), jnp.float32),
        grid_spec=pltpu.PrefetchScalarGridSpec(
            num_scalar_prefetch=0,
            grid=grid,
            in_specs=[
                pl.BlockSpec((cout_pad, k_pad), lambda i: (0, 0)),   # weights (resident)
                pl.BlockSpec((k_pad, tile_m), lambda i: (0, i)),     # patch tile
            ],
            out_specs=pl.BlockSpec((cout_pad, tile_m), lambda i: (0, i)),
        ),
        compiler_params=pltpu.CompilerParams(
            dimension_semantics=("parallel",),          # M tiles split across TCs on v7x
        ),
    )(w_aug, p_full)

    # (8, M_pad) -> valid (Cout, N, Ho, Wo) -> NCHW (tiny epilogue: 3*288 elems).
    return out[:cout, :m].reshape(cout, n, ho, wo).transpose(1, 0, 2, 3)


if __name__ == "__main__":
    key = jax.random.PRNGKey(0)
    kx, kw_, kb = jax.random.split(key, 3)

    # Small shapes consistent with the module: batch=2, Cin=14, spatial=16.
    N, CIN, H, W = 2, 14, 16, 16
    COUT, KH, KW = 3, 7, 7

    x3 = jax.random.normal(kx, (N, CIN, H, W), dtype=jnp.float32)

    # Deterministic parameter init (kaiming-uniform-style bound, like PyTorch).
    fan_in = CIN * KH * KW
    bound = 1.0 / (fan_in ** 0.5)
    conv1_w = jax.random.uniform(kw_, (COUT, CIN, KH, KW), jnp.float32, -bound, bound)
    conv1_b = jax.random.uniform(kb, (COUT,), jnp.float32, -bound, bound)

    y = conv2d_gelu(x3, conv1_w, conv1_b, stride=1, padding=1)
    jax.block_until_ready(y)

    # Reference in plain JAX (f32 conv + tanh-approx GELU chain).
    ref_conv = jax.lax.conv_general_dilated(
        x3, conv1_w, window_strides=(1, 1), padding=[(1, 1), (1, 1)],
        dimension_numbers=("NCHW", "OIHW", "NCHW"),
    ) + conv1_b.reshape(1, COUT, 1, 1)
    ref = (0.5 * ref_conv) * (
        jnp.tanh((ref_conv + 0.044715 * ref_conv ** 3) * 0.7978845608028654) + 1.0
    )
    assert y.shape == (N, COUT, H - 4, W - 4), y.shape
    # bf16 matmul operands with f32 accumulation -> loosened tolerance.
    assert jnp.allclose(y, ref, atol=2e-2, rtol=2e-2), float(jnp.max(jnp.abs(y - ref)))

    print("KERNEL_OK")
</pallas_src>

<mosaic_0001>
module attributes {stable_mosaic.version = 11 : i64} {
  func.func @conv_gelu_kernel(%arg0: i32, %arg1: memref<8x768xbf16, #tpu.memory_space<vmem>>, %arg2: memref<768x128xbf16, #tpu.memory_space<vmem>>, %arg3: memref<8x128xf32, #tpu.memory_space<vmem>>) attributes {dimension_semantics = [#tpu.dimension_semantics<parallel>], iteration_bounds = array<i64: 3>, scalar_prefetch = 0 : i64, scratch_operands = 0 : i64, tpu.core_type = #tpu.core_type<tc>, window_params = [{pipeline_mode = #tpu.pipeline_mode<synchronous>, transform_indices = @transform_0, window_bounds = array<i64: 8, 768>}, {transform_indices = @transform_1, window_bounds = array<i64: 768, 128>}, {transform_indices = @transform_2, window_bounds = array<i64: 8, 128>}]} {
    %c0 = arith.constant 0 : index
    %c0_0 = arith.constant 0 : index
    %0 = vector.load %arg1[%c0, %c0_0] : memref<8x768xbf16, #tpu.memory_space<vmem>>, vector<8x768xbf16>
    %c0_1 = arith.constant 0 : index
    %c0_2 = arith.constant 0 : index
    %1 = vector.load %arg2[%c0_1, %c0_2] : memref<768x128xbf16, #tpu.memory_space<vmem>>, vector<768x128xbf16>
    %cst = arith.constant dense<0.000000e+00> : vector<8x128xf32>
    %2 = tpu.matmul %0, %1, %cst {dimension_numbers = #tpu.dot_dimension_numbers<[1], [0], [0], [1], [0, 0, 1, 1], [], []>} : vector<8x768xbf16>, vector<768x128xbf16>, vector<8x128xf32> -> vector<8x128xf32>
    %cst_3 = arith.constant 5.000000e-01 : f32
    %3 = vector.broadcast %cst_3 : f32 to vector<8x128xf32>
    %4 = arith.mulf %2, %3 : vector<8x128xf32>
    %5 = arith.mulf %2, %2 : vector<8x128xf32>
    %6 = arith.mulf %5, %2 : vector<8x128xf32>
    %cst_4 = arith.constant 4.471500e-02 : f32
    %7 = vector.broadcast %cst_4 : f32 to vector<8x128xf32>
    %8 = arith.mulf %6, %7 : vector<8x128xf32>
    %9 = arith.addf %2, %8 : vector<8x128xf32>
    %cst_5 = arith.constant 0.797884583 : f32
    %10 = vector.broadcast %cst_5 : f32 to vector<8x128xf32>
    %11 = arith.mulf %9, %10 : vector<8x128xf32>
    %12 = math.tanh %11 : vector<8x128xf32>
    %cst_6 = arith.constant 1.000000e+00 : f32
    %13 = vector.broadcast %cst_6 : f32 to vector<8x128xf32>
    %14 = arith.addf %12, %13 : vector<8x128xf32>
    %15 = arith.mulf %4, %14 : vector<8x128xf32>
    %c0_7 = arith.constant 0 : index
    %c0_8 = arith.constant 0 : index
    %16 = vector.load %arg3[%c0_7, %c0_8] : memref<8x128xf32, #tpu.memory_space<vmem>>, vector<8x128xf32>
    tpu.vector_store %arg3[%c0_7, %c0_8], %15 {strides = array<i32>} : memref<8x128xf32, #tpu.memory_space<vmem>>, vector<8x128xf32>,
    return
  }
  func.func @transform_0(%arg0: i32) -> (i32, i32) {
    %c0_i32 = arith.constant 0 : i32
    %c0_i32_0 = arith.constant 0 : i32
    %c0_i32_1 = arith.constant 0 : i32
    return %c0_i32, %c0_i32_0 : i32, i32
  }
  func.func @transform_1(%arg0: i32) -> (i32, i32) {
    %c0_i32 = arith.constant 0 : i32
    %c0_i32_0 = arith.constant 0 : i32
    return %c0_i32, %arg0 : i32, i32
  }
  func.func @transform_2(%arg0: i32) -> (i32, i32) {
    %c0_i32 = arith.constant 0 : i32
    %c0_i32_0 = arith.constant 0 : i32
    return %c0_i32, %arg0 : i32, i32
  }
}

</mosaic_0001>

<llo_original>
// kernel: tpu_custom_call.1
$region0: #{tpu_custom_call.1}
  #allocation0 [shape = 'u32[]', space=smem, size = 0x4, offset = 0x4, fixed_abs, tag = 'smem constant byte address 0x4 - core index']
  #allocation1 [shape = 'u32[144,128]{1,0:T(1,128)}', space=vmem, size = 0x12000, scoped, tag = 'internal scratch']
  %s0 = inlined_call_operand.hbm [shape: bf16[8,768], index: 0, kind: input, shape index: {}]
  %s1 = inlined_call_operand.hbm [shape: bf16[768,384], index: 1, kind: input, shape index: {}]
  %s2 = inlined_call_operand.hbm [shape: f32[8,384], index: 2, kind: output, shape index: {}]
  %s3 = sld [smem:[#allocation0]]
  $region49: #{tpu_custom_call.1} parent=0
    _
  %s5 = ssub.s32 1, %s3
  %s6 = scalar_select 0, %s5, %s3
  $region1: #{tpu_custom_call.1} parent=0
    #allocation2 [shape = 'u8[12288]{0}', space=vmem, size = 0x3000, scoped, tag = 'input window, operand 0, single buffered']
    #allocation3 [shape = 's32[2]{0}', space=sflag, size = 0x8, scoped, tag = 'scoped memory for tpu_custom_call.1']
    #allocation4 [shape = 's32[2]{0}', space=sflag, size = 0x8, scoped, tag = 'scoped memory for tpu_custom_call.1']
    #allocation5 [shape = 'u8[393216]{0}', space=vmem, size = 0x60000, scoped, tag = 'input window, operand 1']
    #allocation6 [shape = 's32[2]{0}', space=sflag, size = 0x8, scoped, tag = 'scoped memory for tpu_custom_call.1']
    #allocation7 [shape = 'u8[8192]{0}', space=vmem, size = 0x2000, scoped, tag = 'output window, operand 0']
    %7 = vsyncpa [#allocation3], 0
    %8 = vsyncpa [#allocation6], 0
    %s9 = scalar_lea.sflag [#allocation6], 1
    %10 = vsyncpa %s9, 0
    %11 = vsyncpa [#allocation4], 0
    %s12 = scalar_lea.sflag [#allocation4], 1
    %13 = vsyncpa %s12, 0
    loop: start=0, step=1, limit=5
    $region2: #{tpu_custom_call.1} parent=1 // loop_pre_header
      _
    $region3: #{tpu_custom_call.1} parent=1 // loop_header
      %s15 = sphi 0, %s19
      %p16 = scmp.ge.s32.totalorder %s15, 5
      %s23 = sphi 0, %s23
      %s25 = sphi 0, %s23
      %s26 = sphi 0, %s25
      %s40 = sphi 0, %s26
      %s46 = sphi 0, %s48
      %s49 = sphi 0, %s46
      %s50 = sphi 0, %s49
      %s66 = sphi 0, %s50
      %s72 = sphi 0, %s74
      %s75 = sphi 0, %s72
      %s76 = sphi 0, %s75
      %s92 = sphi 0, %s76
    $region4: #{tpu_custom_call.1} parent=1 // loop_header_branch
      %18 = sbr.rel (%p16) target = $region8
    $region5: #{tpu_custom_call.1} parent=1 // loop_body
      %s20 = ssub.s32 %s15, 1
      %s21 = ssub.s32 %s15, 2
      %s22 = sadd.s32 %s15, 1
      %s24 = sadd.s32 %s23, 1
      %p27 = scmp.eq.s32.totalorder %s15, 2
      %p28 = scmp.ne.s32.totalorder %s23, %s25
      %p29 = scmp.eq.s32.totalorder %s15, 0
      %p30 = por %p28, %p29
      %p31 = scmp.ne.s32.totalorder %s23, %s25
      %p32 = scmp.eq.s32.totalorder %s20, 2
      %p33 = por %p31, %p32
      %p34 = scmp.ne.s32.totalorder %s25, %s26
      %p35 = scmp.eq.s32.totalorder %s20, 0
      %p36 = por %p34, %p35
      %p37 = scmp.ne.s32.totalorder %s25, %s26
      %p38 = scmp.eq.s32.totalorder %s21, 2
      %p39 = por %p37, %p38
      %p41 = scmp.ne.s32.totalorder %s26, %s40
      %p42 = scmp.eq.s32.totalorder %s21, 0
      %p43 = por %p41, %p42
      %s44 = ssub.s32 %s15, %s22
      %p45 = scmp.eq.s32.totalorder %s44, 0
      %s47 = sadd.s32 %s46, 1
      %s48 = scalar_select %p45, %s46, %s47
      %p51 = pneg %p45
      %p52 = scmp.eq.s32.totalorder %s15, 2
      %p53 = por %p51, %p52
      %p54 = scmp.ne.s32.totalorder %s46, %s49
      %p55 = scmp.eq.s32.totalorder %s15, 0
      %p56 = por %p54, %p55
      %p57 = scmp.ne.s32.totalorder %s46, %s49
      %p58 = scmp.eq.s32.totalorder %s20, 2
      %p59 = por %p57, %p58
      %p60 = scmp.ne.s32.totalorder %s49, %s50
      %p61 = scmp.eq.s32.totalorder %s20, 0
      %p62 = por %p60, %p61
      %p63 = scmp.ne.s32.totalorder %s49, %s50
      %p64 = scmp.eq.s32.totalorder %s21, 2
      %p65 = por %p63, %p64
      %p67 = scmp.ne.s32.totalorder %s50, %s66
      %p68 = scmp.eq.s32.totalorder %s21, 0
      %p69 = por %p67, %p68
      %s70 = ssub.s32 %s15, %s22
      %p71 = scmp.eq.s32.totalorder %s70, 0
      %s73 = sadd.s32 %s72, 1
      %s74 = scalar_select %p71, %s72, %s73
      %p77 = pneg %p71
      %p78 = scmp.eq.s32.totalorder %s15, 2
      %p79 = por %p77, %p78
      %p80 = scmp.ne.s32.totalorder %s72, %s75
      %p81 = scmp.eq.s32.totalorder %s15, 0
      %p82 = por %p80, %p81
      %p83 = scmp.ne.s32.totalorder %s72, %s75
      %p84 = scmp.eq.s32.totalorder %s20, 2
      %p85 = por %p83, %p84
      %p86 = scmp.ne.s32.totalorder %s75, %s76
      %p87 = scmp.eq.s32.totalorder %s20, 0
      %p88 = por %p86, %p87
      %p89 = scmp.ne.s32.totalorder %s75, %s76
      %p90 = scmp.eq.s32.totalorder %s21, 2
      %p91 = por %p89, %p90
      %p93 = scmp.ne.s32.totalorder %s76, %s92
      %p94 = scmp.eq.s32.totalorder %s21, 0
      %p95 = por %p93, %p94
      %p96 = scmp.le.s32.totalorder 1, %s15
      %p97 = scmp.lt.s32.totalorder %s15, 4
      %p98 = pnand %p96, %p97
      %p99 = pneg %p98
      // Predicated region
      $region9: #{tpu_custom_call.1} parent=5 // pred_check
        _
      $region10: #{tpu_custom_call.1} parent=5 // pred_check_branch
        %101 = sbr.rel (%p98) target = $region12
      $region11: #{tpu_custom_call.1} parent=5 // pred_region
        %s102 = ssub.s32 %s15, 1
        // Predicated region
        $region13: #{tpu_custom_call.1} parent=11 // pred_check
          %p103 = pneg %p36
        $region14: #{tpu_custom_call.1} parent=11 // pred_check_branch
          %105 = sbr.rel (%p103) target = $region16
        $region15: #{tpu_custom_call.1} parent=11 // pred_region
          %s107 = ssub.s32 384, 384
          %108 = vsyncadd [#allocation3], %s107
          %s110 = sshll.u32 [#allocation2], 4
          %s111 = int_to_ptr.vmem [resolvable:$true] %s110
          %113 = dma.hbm_to_vmem [thread:$0]  %s0, 384, %s111, [#allocation3]
        $region16: #{tpu_custom_call.1} parent=11 // pred_fallthru
          _
      $region12: #{tpu_custom_call.1} parent=5 // pred_fallthru
        _
      %p114 = scmp.lt.s32.totalorder %s15, 3
      // Predicated region
      $region17: #{tpu_custom_call.1} parent=5 // pred_check
        %p115 = pneg %p114
      $region18: #{tpu_custom_call.1} parent=5 // pred_check_branch
        %117 = sbr.rel (%p115) target = $region20
      $region19: #{tpu_custom_call.1} parent=5 // pred_region
        // Predicated region
        $region21: #{tpu_custom_call.1} parent=19 // pred_check
          %p118 = pneg %p56
        $region22: #{tpu_custom_call.1} parent=19 // pred_check_branch
          %120 = sbr.rel (%p118) target = $region24
        $region23: #{tpu_custom_call.1} parent=19 // pred_region
          %s121 = sand.u32 %s46, 1
          %s122 = scalar_lea.sflag [#allocation6], %s121
          %s123 = sand.u32 %s46, 1
          %s124 = smul.addr %s123, 384
          %s125 = scalar_lea.vmem [#allocation5], %s124
          %s127 = ssub.s32 6144, 6144
          %128 = vsyncadd %s122, %s127
          %s129 = smul.addr %s15, 64
          %s130 = scalar_lea.hbm %s1, %s129
          %s131 = sshll.u32 %s125, 4
          %s132 = int_to_ptr.vmem [resolvable:$true] %s131
          %137 = dma.hbm_to_vmem [thread:$0]  %s130, 6144, %s132, %s122, 192, 64, 4
        $region24: #{tpu_custom_call.1} parent=19 // pred_fallthru
          _
      $region20: #{tpu_custom_call.1} parent=5 // pred_fallthru
        _
      %p138 = scmp.le.s32.totalorder 1, %s15
      %p139 = scmp.lt.s32.totalorder %s15, 4
      %p140 = pnand %p138, %p139
      %p141 = pneg %p140
      // Predicated region
      $region25: #{tpu_custom_call.1} parent=5 // pred_check
        _
      $region26: #{tpu_custom_call.1} parent=5 // pred_check_branch
        %143 = sbr.rel (%p140) target = $region28
      $region27: #{tpu_custom_call.1} parent=5 // pred_region
        %s144 = ssub.s32 %s15, 1
        // Predicated region
        $region29: #{tpu_custom_call.1} parent=27 // pred_check
          %p145 = pneg %p36
        $region30: #{tpu_custom_call.1} parent=27 // pred_check_branch
          %147 = sbr.rel (%p145) target = $region32
        $region31: #{tpu_custom_call.1} parent=27 // pred_region
          %148 = dma.done [#allocation3], 384
        $region32: #{tpu_custom_call.1} parent=27 // pred_fallthru
          _
        %s149 = sand.u32 %s49, 1
        %s150 = scalar_lea.sflag [#allocation6], %s149
        %s151 = sand.u32 %s49, 1
        %s152 = smul.addr %s151, 384
        %s153 = scalar_lea.vmem [#allocation5], %s152
        // Predicated region
        $region33: #{tpu_custom_call.1} parent=27 // pred_check
          %p154 = pneg %p62
        $region34: #{tpu_custom_call.1} parent=27 // pred_check_branch
          %156 = sbr.rel (%p154) target = $region36
        $region35: #{tpu_custom_call.1} parent=27 // pred_region
          %157 = dma.done %s150, 6144
        $region36: #{tpu_custom_call.1} parent=27 // pred_fallthru
          _
        %p158 = pneg %p36
        %p159 = pneg %p33
        %s160 = sand.u32 %s49, 1
        %s161 = scalar_lea.sflag [#allocation6], %s160
        %s162 = sand.u32 %s49, 1
        %s163 = smul.addr %s162, 384
        %s164 = scalar_lea.vmem [#allocation5], %s163
        %p165 = pneg %p62
        %p166 = pneg %p59
        %p167 = pneg %p88
        %p168 = pneg %p85
        %s169 = sand.u32 %s75, 1
        %s170 = scalar_lea.sflag [#allocation4], %s169
        %s171 = sand.u32 %s75, 1
        %s172 = smul.addr %s171, 8
        %s173 = scalar_lea.vmem [#allocation7], %s172
        %v175 = vld [vmem:[#allocation2] sm:$0xff]
        %v176 = vld [vmem:[#allocation2 + $0x8] sm:$0xff]
        %v177 = vld [vmem:[#allocation2 + $0x10] sm:$0xff]
        %v178 = vld [vmem:[%s153] sm:$0xf]
        %v179 = vld [vmem:[%s153 + $0x4] sm:$0xf]
        %v180 = vld [vmem:[%s153 + $0x8] sm:$0xf]
        %v181 = vld [vmem:[%s153 + $0xc] sm:$0xf]
        %v182 = vld [vmem:[%s153 + $0x10] sm:$0xf]
        %v183 = vld [vmem:[%s153 + $0x14] sm:$0xf]
        %v184 = vld [vmem:[%s153 + $0x18] sm:$0xf]
        %v185 = vld [vmem:[%s153 + $0x1c] sm:$0xf]
        %v186 = vld [vmem:[%s153 + $0x20] sm:$0xf]
        %v187 = vld [vmem:[%s153 + $0x24] sm:$0xf]
        %v188 = vld [vmem:[%s153 + $0x28] sm:$0xf]
        %v189 = vld [vmem:[%s153 + $0x2c] sm:$0xf]
        %v190 = vld [vmem:[%s153 + $0x30] sm:$0xf]
        %v191 = vld [vmem:[%s153 + $0x34] sm:$0xf]
        %v192 = vld [vmem:[%s153 + $0x38] sm:$0xf]
        %v193 = vld [vmem:[%s153 + $0x3c] sm:$0xf]
        %v194 = vld [vmem:[%s153 + $0x40] sm:$0xf]
        %v195 = vld [vmem:[%s153 + $0x44] sm:$0xf]
        %v196 = vld [vmem:[%s153 + $0x48] sm:$0xf]
        %v197 = vld [vmem:[%s153 + $0x4c] sm:$0xf]
        %v198 = vld [vmem:[%s153 + $0x50] sm:$0xf]
        %v199 = vld [vmem:[%s153 + $0x54] sm:$0xf]
        %v200 = vld [vmem:[%s153 + $0x58] sm:$0xf]
        %v201 = vld [vmem:[%s153 + $0x5c] sm:$0xf]
        %v202 = vld [vmem:[%s153 + $0x60] sm:$0xf]
        %v203 = vld [vmem:[%s153 + $0x64] sm:$0xf]
        %v204 = vld [vmem:[%s153 + $0x68] sm:$0xf]
        %v205 = vld [vmem:[%s153 + $0x6c] sm:$0xf]
        %v206 = vld [vmem:[%s153 + $0x70] sm:$0xf]
        %v207 = vld [vmem:[%s153 + $0x74] sm:$0xf]
        %v208 = vld [vmem:[%s153 + $0x78] sm:$0xf]
        %v209 = vld [vmem:[%s153 + $0x7c] sm:$0xf]
        %v210 = vld [vmem:[%s153 + $0x80] sm:$0xf]
        %v211 = vld [vmem:[%s153 + $0x84] sm:$0xf]
        %v212 = vld [vmem:[%s153 + $0x88] sm:$0xf]
        %v213 = vld [vmem:[%s153 + $0x8c] sm:$0xf]
        %v214 = vld [vmem:[%s153 + $0x90] sm:$0xf]
        %v215 = vld [vmem:[%s153 + $0x94] sm:$0xf]
        %v216 = vld [vmem:[%s153 + $0x98] sm:$0xf]
        %v217 = vld [vmem:[%s153 + $0x9c] sm:$0xf]
        %v218 = vld [vmem:[%s153 + $0xa0] sm:$0xf]
        %v219 = vld [vmem:[%s153 + $0xa4] sm:$0xf]
        %v220 = vld [vmem:[%s153 + $0xa8] sm:$0xf]
        %v221 = vld [vmem:[%s153 + $0xac] sm:$0xf]
        %v222 = vld [vmem:[%s153 + $0xb0] sm:$0xf]
        %v223 = vld [vmem:[%s153 + $0xb4] sm:$0xf]
        %v224 = vld [vmem:[%s153 + $0xb8] sm:$0xf]
        %v225 = vld [vmem:[%s153 + $0xbc] sm:$0xf]
        %v226 = vld [vmem:[%s153 + $0xc0] sm:$0xf]
        %v227 = vld [vmem:[%s153 + $0xc4] sm:$0xf]
        %v228 = vld [vmem:[%s153 + $0xc8] sm:$0xf]
        %v229 = vld [vmem:[%s153 + $0xcc] sm:$0xf]
        %v230 = vld [vmem:[%s153 + $0xd0] sm:$0xf]
        %v231 = vld [vmem:[%s153 + $0xd4] sm:$0xf]
        %v232 = vld [vmem:[%s153 + $0xd8] sm:$0xf]
        %v233 = vld [vmem:[%s153 + $0xdc] sm:$0xf]
        %v234 = vld [vmem:[%s153 + $0xe0] sm:$0xf]
        %v235 = vld [vmem:[%s153 + $0xe4] sm:$0xf]
        %v236 = vld [vmem:[%s153 + $0xe8] sm:$0xf]
        %v237 = vld [vmem:[%s153 + $0xec] sm:$0xf]
        %v238 = vld [vmem:[%s153 + $0xf0] sm:$0xf]
        %v239 = vld [vmem:[%s153 + $0xf4] sm:$0xf]
        %v240 = vld [vmem:[%s153 + $0xf8] sm:$0xf]
        %v241 = vld [vmem:[%s153 + $0xfc] sm:$0xf]
        %v242 = vld [vmem:[%s153 + $0x100] sm:$0xf]
        %v243 = vld [vmem:[%s153 + $0x104] sm:$0xf]
        %v244 = vld [vmem:[%s153 + $0x108] sm:$0xf]
        %v245 = vld [vmem:[%s153 + $0x10c] sm:$0xf]
        %v246 = vld [vmem:[%s153 + $0x110] sm:$0xf]
        %v247 = vld [vmem:[%s153 + $0x114] sm:$0xf]
        %v248 = vld [vmem:[%s153 + $0x118] sm:$0xf]
        %v249 = vld [vmem:[%s153 + $0x11c] sm:$0xf]
        %v250 = vld [vmem:[%s153 + $0x120] sm:$0xf]
        %v251 = vld [vmem:[%s153 + $0x124] sm:$0xf]
        %v252 = vld [vmem:[%s153 + $0x128] sm:$0xf]
        %v253 = vld [vmem:[%s153 + $0x12c] sm:$0xf]
        %v254 = vld [vmem:[%s153 + $0x130] sm:$0xf]
        %v255 = vld [vmem:[%s153 + $0x134] sm:$0xf]
        %v256 = vld [vmem:[%s153 + $0x138] sm:$0xf]
        %v257 = vld [vmem:[%s153 + $0x13c] sm:$0xf]
        %v258 = vld [vmem:[%s153 + $0x140] sm:$0xf]
        %v259 = vld [vmem:[%s153 + $0x144] sm:$0xf]
        %v260 = vld [vmem:[%s153 + $0x148] sm:$0xf]
        %v261 = vld [vmem:[%s153 + $0x14c] sm:$0xf]
        %v262 = vld [vmem:[%s153 + $0x150] sm:$0xf]
        %v263 = vld [vmem:[%s153 + $0x154] sm:$0xf]
        %v264 = vld [vmem:[%s153 + $0x158] sm:$0xf]
        %v265 = vld [vmem:[%s153 + $0x15c] sm:$0xf]
        %v266 = vld [vmem:[%s153 + $0x160] sm:$0xf]
        %v267 = vld [vmem:[%s153 + $0x164] sm:$0xf]
        %v268 = vld [vmem:[%s153 + $0x168] sm:$0xf]
        %v269 = vld [vmem:[%s153 + $0x16c] sm:$0xf]
        %v270 = vld [vmem:[%s153 + $0x170] sm:$0xf]
        %v271 = vld [vmem:[%s153 + $0x174] sm:$0xf]
        %v272 = vld [vmem:[%s153 + $0x178] sm:$0xf]
        %v273 = vld [vmem:[%s153 + $0x17c] sm:$0xf]
        %v277 = vunpack.c.l.b16 %v175
        %v278 = vunpack.c.h.b16 %v175
        %v279 = vunpack.c.l.b16 %v176
        %v280 = vunpack.c.h.b16 %v176
        %v281 = vunpack.c.l.b16 %v177
        %v282 = vunpack.c.h.b16 %v177
        %v283 = vpack.c.b16 %v277, %v277
        %v284 = vpack.c.b16 %v278, %v278
        %v285 = vpack.c.b16 %v279, %v279
        %v286 = vpack.c.b16 %v280, %v280
        %v287 = vpack.c.b16 %v281, %v281
        %v288 = vpack.c.b16 %v282, %v282
        %v391 = vunpack.c.l.b16 %v178
        %v392 = vunpack.c.l.b16 %v179
        %v393 = vunpack.c.l.b16 %v180
        %v394 = vunpack.c.l.b16 %v181
        %v395 = vunpack.c.l.b16 %v182
        %v396 = vunpack.c.l.b16 %v183
        %v397 = vunpack.c.l.b16 %v184
        %v398 = vunpack.c.l.b16 %v185
        %v399 = vunpack.c.l.b16 %v186
        %v400 = vunpack.c.l.b16 %v187
        %v401 = vunpack.c.l.b16 %v188
        %v402 = vunpack.c.l.b16 %v189
        %v403 = vunpack.c.l.b16 %v190
        %v404 = vunpack.c.l.b16 %v191
        %v405 = vunpack.c.l.b16 %v192
        %v406 = vunpack.c.l.b16 %v193
        %v407 = vunpack.c.l.b16 %v194
        %v408 = vunpack.c.l.b16 %v195
        %v409 = vunpack.c.l.b16 %v196
        %v410 = vunpack.c.l.b16 %v197
        %v411 = vunpack.c.l.b16 %v198
        %v412 = vunpack.c.l.b16 %v199
        %v413 = vunpack.c.l.b16 %v200
        %v414 = vunpack.c.l.b16 %v201
        %v415 = vunpack.c.l.b16 %v202
        %v416 = vunpack.c.l.b16 %v203
        %v417 = vunpack.c.l.b16 %v204
        %v418 = vunpack.c.l.b16 %v205
        %v419 = vunpack.c.l.b16 %v206
        %v420 = vunpack.c.l.b16 %v207
        %v421 = vunpack.c.l.b16 %v208
        %v422 = vunpack.c.l.b16 %v209
        %v423 = vunpack.c.l.b16 %v210
        %v424 = vunpack.c.l.b16 %v211
        %v425 = vunpack.c.l.b16 %v212
        %v426 = vunpack.c.l.b16 %v213
        %v427 = vunpack.c.l.b16 %v214
        %v428 = vunpack.c.l.b16 %v215
        %v429 = vunpack.c.l.b16 %v216
        %v430 = vunpack.c.l.b16 %v217
        %v431 = vunpack.c.l.b16 %v218
        %v432 = vunpack.c.l.b16 %v219
        %v433 = vunpack.c.l.b16 %v220
        %v434 = vunpack.c.l.b16 %v221
        %v435 = vunpack.c.l.b16 %v222
        %v436 = vunpack.c.l.b16 %v223
        %v437 = vunpack.c.l.b16 %v224
        %v438 = vunpack.c.l.b16 %v225
        %v439 = vunpack.c.l.b16 %v226
        %v440 = vunpack.c.l.b16 %v227
        %v441 = vunpack.c.l.b16 %v228
        %v442 = vunpack.c.l.b16 %v229
        %v443 = vunpack.c.l.b16 %v230
        %v444 = vunpack.c.l.b16 %v231
        %v445 = vunpack.c.l.b16 %v232
        %v446 = vunpack.c.l.b16 %v233
        %v447 = vunpack.c.l.b16 %v234
        %v448 = vunpack.c.l.b16 %v235
        %v449 = vunpack.c.l.b16 %v236
        %v450 = vunpack.c.l.b16 %v237
        %v451 = vunpack.c.l.b16 %v238
        %v452 = vunpack.c.l.b16 %v239
        %v453 = vunpack.c.l.b16 %v240
        %v454 = vunpack.c.l.b16 %v241
        %v455 = vunpack.c.l.b16 %v242
        %v456 = vunpack.c.l.b16 %v243
        %v457 = vunpack.c.l.b16 %v244
        %v458 = vunpack.c.l.b16 %v245
        %v459 = vunpack.c.l.b16 %v246
        %v460 = vunpack.c.l.b16 %v247
        %v461 = vunpack.c.l.b16 %v248
        %v462 = vunpack.c.l.b16 %v249
        %v463 = vunpack.c.l.b16 %v250
        %v464 = vunpack.c.l.b16 %v251
        %v465 = vunpack.c.l.b16 %v252
        %v466 = vunpack.c.l.b16 %v253
        %v467 = vunpack.c.l.b16 %v254
        %v468 = vunpack.c.l.b16 %v255
        %v469 = vunpack.c.l.b16 %v256
        %v470 = vunpack.c.l.b16 %v257
        %v471 = vunpack.c.l.b16 %v258
        %v472 = vunpack.c.l.b16 %v259
        %v473 = vunpack.c.l.b16 %v260
        %v474 = vunpack.c.l.b16 %v261
        %v475 = vunpack.c.l.b16 %v262
        %v476 = vunpack.c.l.b16 %v263
        %v477 = vunpack.c.l.b16 %v264
        %v478 = vunpack.c.l.b16 %v265
        %v479 = vunpack.c.l.b16 %v266
        %v480 = vunpack.c.l.b16 %v267
        %v481 = vunpack.c.l.b16 %v268
        %v482 = vunpack.c.l.b16 %v269
        %v483 = vunpack.c.l.b16 %v270
        %v484 = vunpack.c.l.b16 %v271
        %v485 = vunpack.c.l.b16 %v272
        %v486 = vunpack.c.l.b16 %v273
        %v487 = vpack.c.b16 %v392, %v391
        %v488 = vpack.c.b16 %v394, %v393
        %v489 = vpack.c.b16 %v396, %v395
        %v490 = vpack.c.b16 %v398, %v397
        %v491 = vpack.c.b16 %v400, %v399
        %v492 = vpack.c.b16 %v402, %v401
        %v493 = vpack.c.b16 %v404, %v403
        %v494 = vpack.c.b16 %v406, %v405
        %v495 = vpack.c.b16 %v408, %v407
        %v496 = vpack.c.b16 %v410, %v409
        %v497 = vpack.c.b16 %v412, %v411
        %v498 = vpack.c.b16 %v414, %v413
        %v499 = vpack.c.b16 %v416, %v415
        %v500 = vpack.c.b16 %v418, %v417
        %v501 = vpack.c.b16 %v420, %v419
        %v502 = vpack.c.b16 %v422, %v421
        %v503 = vpack.c.b16 %v424, %v423
        %v504 = vpack.c.b16 %v426, %v425
        %v505 = vpack.c.b16 %v428, %v427
        %v506 = vpack.c.b16 %v430, %v429
        %v507 = vpack.c.b16 %v432, %v431
        %v508 = vpack.c.b16 %v434, %v433
        %v509 = vpack.c.b16 %v436, %v435
        %v510 = vpack.c.b16 %v438, %v437
        %v511 = vpack.c.b16 %v440, %v439
        %v512 = vpack.c.b16 %v442, %v441
        %v513 = vpack.c.b16 %v444, %v443
        %v514 = vpack.c.b16 %v446, %v445
        %v515 = vpack.c.b16 %v448, %v447
        %v516 = vpack.c.b16 %v450, %v449
        %v517 = vpack.c.b16 %v452, %v451
        %v518 = vpack.c.b16 %v454, %v453
        %v519 = vpack.c.b16 %v456, %v455
        %v520 = vpack.c.b16 %v458, %v457
        %v521 = vpack.c.b16 %v460, %v459
        %v522 = vpack.c.b16 %v462, %v461
        %v523 = vpack.c.b16 %v464, %v463
        %v524 = vpack.c.b16 %v466, %v465
        %v525 = vpack.c.b16 %v468, %v467
        %v526 = vpack.c.b16 %v470, %v469
        %v527 = vpack.c.b16 %v472, %v471
        %v528 = vpack.c.b16 %v474, %v473
        %v529 = vpack.c.b16 %v476, %v475
        %v530 = vpack.c.b16 %v478, %v477
        %v531 = vpack.c.b16 %v480, %v479
        %v532 = vpack.c.b16 %v482, %v481
        %v533 = vpack.c.b16 %v484, %v483
        %v534 = vpack.c.b16 %v486, %v485
        %583 = vmatprep.subr.bf16.mxu0 0
        %584 = vmatpush1.bf16.msra.mxu0 %v487
        %585 = vmatprep.subr.bf16.mxu0 0
        %586 = vmatpush1.bf16.msra.mxu0 %v488
        %587 = vmatprep.subr.bf16.mxu0 0
        %588 = vmatpush1.bf16.msra.mxu0 %v489
        %589 = vmatprep.subr.bf16.mxu0 0
        %590 = vmatpush1.bf16.msra.mxu0 %v490
        %591 = vmatprep.subr.bf16.mxu0 0
        %592 = vmatpush1.bf16.msra.mxu0 %v491
        %593 = vmatprep.subr.bf16.mxu0 0
        %594 = vmatpush1.bf16.msra.mxu0 %v492
        %595 = vmatprep.subr.bf16.mxu0 0
        %596 = vmatpush1.bf16.msra.mxu0 %v493
        %597 = vmatprep.subr.bf16.mxu0 0
        %598 = vmatpush1.bf16.msra.mxu0 %v494
        %599 = vmatprep.subr.bf16.mxu0 0
        %600 = vmatpush1.bf16.msra.mxu0 %v495
        %601 = vmatprep.subr.bf16.mxu0 0
        %602 = vmatpush1.bf16.msra.mxu0 %v496
        %603 = vmatprep.subr.bf16.mxu0 0
        %604 = vmatpush1.bf16.msra.mxu0 %v497
        %605 = vmatprep.subr.bf16.mxu0 0
        %606 = vmatpush1.bf16.msra.mxu0 %v498
        %607 = vmatprep.subr.bf16.mxu0 0
        %608 = vmatpush1.bf16.msra.mxu0 %v499
        %609 = vmatprep.subr.bf16.mxu0 0
        %610 = vmatpush1.bf16.msra.mxu0 %v500
        %611 = vmatprep.subr.bf16.mxu0 0
        %612 = vmatpush1.bf16.msra.mxu0 %v501
        %613 = vmatprep.subr.bf16.mxu0 0
        %614 = vmatpush1.bf16.msra.mxu0 %v502
        %615 = vmatprep.mubr.bf16.mxu0 %v284
        %616 = vmatmul.mubr.bf16.gmra.mrb[0].mxu0 %v283
        %v617 = vpop.f32.mrb[0].mxu0
        %v618 = vadd.f32 0.0, %v617
        %v619 = vpop.f32.mrb[0].mxu0
        %v620 = vpop.f32.mrb[0].mxu0
        %v621 = vpop.f32.mrb[0].mxu0
        %622 = vdwg.mxu0
        %623 = vmatprep.subr.bf16.mxu0 0
        %624 = vmatpush1.bf16.msra.mxu0 %v503
        %625 = vmatprep.subr.bf16.mxu0 0
        %626 = vmatpush1.bf16.msra.mxu0 %v504
        %627 = vmatprep.subr.bf16.mxu0 0
        %628 = vmatpush1.bf16.msra.mxu0 %v505
        %629 = vmatprep.subr.bf16.mxu0 0
        %630 = vmatpush1.bf16.msra.mxu0 %v506
        %631 = vmatprep.subr.bf16.mxu0 0
        %632 = vmatpush1.bf16.msra.mxu0 %v507
        %633 = vmatprep.subr.bf16.mxu0 0
        %634 = vmatpush1.bf16.msra.mxu0 %v508
        %635 = vmatprep.subr.bf16.mxu0 0
        %636 = vmatpush1.bf16.msra.mxu0 %v509
        %637 = vmatprep.subr.bf16.mxu0 0
        %638 = vmatpush1.bf16.msra.mxu0 %v510
        %639 = vmatprep.subr.bf16.mxu0 0
        %640 = vmatpush1.bf16.msra.mxu0 %v511
        %641 = vmatprep.subr.bf16.mxu0 0
        %642 = vmatpush1.bf16.msra.mxu0 %v512
        %643 = vmatprep.subr.bf16.mxu0 0
        %644 = vmatpush1.bf16.msra.mxu0 %v513
        %645 = vmatprep.subr.bf16.mxu0 0
        %646 = vmatpush1.bf16.msra.mxu0 %v514
        %647 = vmatprep.subr.bf16.mxu0 0
        %648 = vmatpush1.bf16.msra.mxu0 %v515
        %649 = vmatprep.subr.bf16.mxu0 0
        %650 = vmatpush1.bf16.msra.mxu0 %v516
        %651 = vmatprep.subr.bf16.mxu0 0
        %652 = vmatpush1.bf16.msra.mxu0 %v517
        %653 = vmatprep.subr.bf16.mxu0 0
        %654 = vmatpush1.bf16.msra.mxu0 %v518
        %655 = vmatprep.mubr.bf16.mxu0 %v286
        %656 = vmatmul.mubr.bf16.gmra.mrb[0].mxu0 %v285
        %v657 = vpop.f32.mrb[0].mxu0
        %v658 = vadd.f32 %v618, %v657
        %v659 = vpop.f32.mrb[0].mxu0
        %v660 = vpop.f32.mrb[0].mxu0
        %v661 = vpop.f32.mrb[0].mxu0
        %662 = vdwg.mxu0
        %663 = vmatprep.subr.bf16.mxu0 0
        %664 = vmatpush1.bf16.msra.mxu0 %v519
        %665 = vmatprep.subr.bf16.mxu0 0
        %666 = vmatpush1.bf16.msra.mxu0 %v520
        %667 = vmatprep.subr.bf16.mxu0 0
        %668 = vmatpush1.bf16.msra.mxu0 %v521
        %669 = vmatprep.subr.bf16.mxu0 0
        %670 = vmatpush1.bf16.msra.mxu0 %v522
        %671 = vmatprep.subr.bf16.mxu0 0
        %672 = vmatpush1.bf16.msra.mxu0 %v523
        %673 = vmatprep.subr.bf16.mxu0 0
        %674 = vmatpush1.bf16.msra.mxu0 %v524
        %675 = vmatprep.subr.bf16.mxu0 0
        %676 = vmatpush1.bf16.msra.mxu0 %v525
        %677 = vmatprep.subr.bf16.mxu0 0
        %678 = vmatpush1.bf16.msra.mxu0 %v526
        %679 = vmatprep.subr.bf16.mxu0 0
        %680 = vmatpush1.bf16.msra.mxu0 %v527
        %681 = vmatprep.subr.bf16.mxu0 0
        %682 = vmatpush1.bf16.msra.mxu0 %v528
        %683 = vmatprep.subr.bf16.mxu0 0
        %684 = vmatpush1.bf16.msra.mxu0 %v529
        %685 = vmatprep.subr.bf16.mxu0 0
        %686 = vmatpush1.bf16.msra.mxu0 %v530
        %687 = vmatprep.subr.bf16.mxu0 0
        %688 = vmatpush1.bf16.msra.mxu0 %v531
        %689 = vmatprep.subr.bf16.mxu0 0
        %690 = vmatpush1.bf16.msra.mxu0 %v532
        %691 = vmatprep.subr.bf16.mxu0 0
        %692 = vmatpush1.bf16.msra.mxu0 %v533
        %693 = vmatprep.subr.bf16.mxu0 0
        %694 = vmatpush1.bf16.msra.mxu0 %v534
        %695 = vmatprep.mubr.bf16.mxu0 %v288
        %696 = vmatmul.mubr.bf16.gmra.mrb[0].mxu0 %v287
        %v697 = vpop.f32.mrb[0].mxu0
        %v698 = vadd.f32 %v658, %v697
        %v699 = vpop.f32.mrb[0].mxu0
        %v700 = vpop.f32.mrb[0].mxu0
        %v701 = vpop.f32.mrb[0].mxu0
        %702 = vdwg.mxu0
        %v703 = vmul.f32 %v698, 0.5
        %v704 = vmul.f32 %v698, %v698
        %v705 = vmul.f32 %v704, %v698
        %v706 = vmul.f32 %v705, 0.044715
        %v707 = vadd.f32 %v698, %v706
        %v708 = vmul.f32 %v707, 0.7978846
        %v709 = vtanh.pop %v708
        %v710 = vadd.f32 %v709, 1.0
        %v711 = vmul.f32 %v703, %v710
        %712 = vst [vmem:[%s173] sm:$0xff] %v711
        %s713 = sand.u32 %s75, 1
        %s714 = scalar_lea.sflag [#allocation4], %s713
        %s715 = sand.u32 %s75, 1
        %s716 = smul.addr %s715, 8
        %s717 = scalar_lea.vmem [#allocation7], %s716
        // Predicated region
        $region37: #{tpu_custom_call.1} parent=27 // pred_check
          %p718 = pneg %p85
        $region38: #{tpu_custom_call.1} parent=27 // pred_check_branch
          %720 = sbr.rel (%p718) target = $region40
        $region39: #{tpu_custom_call.1} parent=27 // pred_region
          %s722 = ssub.s32 128, 128
          %723 = vsyncadd %s714, %s722
          %s724 = smul.addr %s20, 128
          %s725 = scalar_lea.hbm %s2, %s724
          %s727 = sshll.u32 %s717, 4
          %s728 = int_to_ptr.vmem [resolvable:$true] %s727
          %730 = dma.vmem_to_hbm [thread:$0]  %s728, 128, %s725, %s714
        $region40: #{tpu_custom_call.1} parent=27 // pred_fallthru
          _
      $region28: #{tpu_custom_call.1} parent=5 // pred_fallthru
        _
      %p731 = scmp.le.s32.totalorder 2, %s15
      // Predicated region
      $region41: #{tpu_custom_call.1} parent=5 // pred_check
        %p732 = pneg %p731
      $region42: #{tpu_custom_call.1} parent=5 // pred_check_branch
        %734 = sbr.rel (%p732) target = $region44
      $region43: #{tpu_custom_call.1} parent=5 // pred_region
        %s735 = ssub.s32 %s15, 2
        // Predicated region
        $region45: #{tpu_custom_call.1} parent=43 // pred_check
          %p736 = pneg %p91
        $region46: #{tpu_custom_call.1} parent=43 // pred_check_branch
          %738 = sbr.rel (%p736) target = $region48
        $region47: #{tpu_custom_call.1} parent=43 // pred_region
          %s739 = sand.u32 %s76, 1
          %s740 = scalar_lea.sflag [#allocation4], %s739
          %s741 = sand.u32 %s76, 1
          %s742 = smul.addr %s741, 8
          %s743 = scalar_lea.vmem [#allocation7], %s742
          %744 = dma.done %s740, 128
        $region48: #{tpu_custom_call.1} parent=43 // pred_fallthru
          _
      $region44: #{tpu_custom_call.1} parent=5 // pred_fallthru
        _
    $region6: #{tpu_custom_call.1} parent=1 // loop_footer
      %s19 = sadd.s32 1, %s15
    $region7: #{tpu_custom_call.1} parent=1 // loop_footer_branch
      %14 = sbr.rel target = $region3
    $region8: #{tpu_custom_call.1} parent=1 // loop_exit
      _
    %745 = vsyncpa [#allocation3], 1
    %s746 = scalar_lea.sflag [#allocation3], 1
    %747 = vsyncpa %s746, 1
    %748 = vsyncpa [#allocation6], 1
    %s749 = scalar_lea.sflag [#allocation6], 1
    %750 = vsyncpa %s749, 1
    %751 = vsyncpa [#allocation4], 1
    %s752 = scalar_lea.sflag [#allocation4], 1
    %753 = vsyncpa %s752, 1

</llo_original>
